<compile_context>
chip_gen: v5e
topology: v5e:2x2
jax: 0.10.0
libtpu: 0.0.40
codegen_flags: <defaults>
</compile_context>

<pallas_src>
import functools

import jax
import jax.numpy as jnp
from jax.experimental import pallas as pl
from jax.experimental.pallas import tpu as pltpu


_LANE = 128
_SUBLANE = 8
_VMEM_LIMIT_BYTES = 48 * 1024 * 1024  # safe on v5e/v6e (128 MiB) and v7x (64 MiB physical)

_ACTIVATIONS = {
    "tanh": jnp.tanh,
    "relu": lambda x: jnp.maximum(x, 0.0),
    "gelu": jax.nn.gelu,
    "linear": lambda x: x,
}


def _round_up(x, m):
    return ((x + m - 1) // m) * m


def _choose_seq_tile(t, tb, d, itemsize, budget_bytes=4 << 20):
    """Seq tile so one (tb, tt, d) features block stays ~<= 4 MiB (double-buffered)."""
    tt = max(1, budget_bytes // max(1, tb * d * itemsize))
    if tt >= t:
        return t
    return max(_SUBLANE, (tt // _SUBLANE) * _SUBLANE)


# ----------------------------- kernels --------------------------------------


def _cls_head_kernel(x_ref, w1_ref, b1_ref, w2_ref, b2_ref, out_ref, *, activation):
    act = _ACTIVATIONS[activation]
    x = x_ref[...]                                             # (TB, D), native dtype -> MXU fast path
    h = jnp.dot(x, w1_ref[...], preferred_element_type=jnp.float32) + b1_ref[...]
    h = act(h)
    h = h.astype(w2_ref.dtype)
    y = jnp.dot(h, w2_ref[...], preferred_element_type=jnp.float32) + b2_ref[...]
    out_ref[...] = y.astype(out_ref.dtype)                     # lane-dense (C padded to 128)


def _mp_head_kernel(feat_ref, inv_len_ref, w1_ref, b1_ref, w2_ref, b2_ref,
                    out_ref, acc_ref, *, activation):
    act = _ACTIVATIONS[activation]
    t = pl.program_id(1)

    @pl.when(t == 0)
    def _():
        acc_ref[...] = jnp.zeros_like(acc_ref)

    # Accumulate the per-tile sequence sum in f32 (correct for bf16 features / long T).
    acc_ref[...] += jnp.sum(feat_ref[...].astype(jnp.float32), axis=1)

    @pl.when(t == pl.num_programs(1) - 1)
    def _():
        x = acc_ref[...] * inv_len_ref[...]                    # (TB, D) mean / length-normalized sum
        x = x.astype(w1_ref.dtype)
        h = jnp.dot(x, w1_ref[...], preferred_element_type=jnp.float32) + b1_ref[...]
        h = act(h)
        h = h.astype(w2_ref.dtype)
        y = jnp.dot(h, w2_ref[...], preferred_element_type=jnp.float32) + b2_ref[...]
        out_ref[...] = y.astype(out_ref.dtype)


# ----------------------------- wrapper ---------------------------------------


def smlp_classification_head(features, w1, b1, w2, b2, *, sen_rep_type="cls",
                             activation="tanh", src_lengths=None):
    """features: [B, T, D]; w1: [D, inner]; b1: [inner] or [1, inner];
    w2: [inner, C]; b2: [C] or [1, C].  Dropout is identity (inference)."""
    B, T, D = features.shape
    inner = w1.shape[1]
    C = w2.shape[1]
    assert w1.shape == (D, inner) and w2.shape == (inner, C)
    b1 = jnp.reshape(b1, (1, inner)).astype(jnp.float32)
    b2 = jnp.reshape(b2, (1, C)).astype(jnp.float32)

    # Lane-dense output: pad num_classes up to a full 128-lane register.
    c_pad = _round_up(C, _LANE)
    if c_pad != C:
        w2 = jnp.pad(w2, ((0, 0), (0, c_pad - C)))
        b2 = jnp.pad(b2, ((0, 0), (0, c_pad - C)))

    # Batch tiling (multiple of 8 sublanes; modest size so tiles fit v7x VMEM too).
    tb = min(256, _round_up(B, _SUBLANE))
    b_pad = _round_up(B, tb)
    nb = b_pad // tb

    if sen_rep_type == "cls":
        # Only the first token leaves HBM: slice before the kernel (1/T of the features read).
        x0 = features[:, 0, :]
        if b_pad != B:
            x0 = jnp.pad(x0, ((0, b_pad - B), (0, 0)))
        kernel = functools.partial(_cls_head_kernel, activation=activation)
        out = pl.pallas_call(
            kernel,
            out_shape=jax.ShapeDtypeStruct((b_pad, c_pad), features.dtype),
            grid_spec=pltpu.PrefetchScalarGridSpec(
                num_scalar_prefetch=0,
                grid=(nb,),
                in_specs=[
                    pl.BlockSpec((tb, D), lambda i: (i, 0)),          # token-0 features tile
                    pl.BlockSpec((D, inner), lambda i: (0, 0)),       # w1 (VMEM-resident)
                    pl.BlockSpec((1, inner), lambda i: (0, 0)),       # b1
                    pl.BlockSpec((inner, c_pad), lambda i: (0, 0)),   # w2 (padded)
                    pl.BlockSpec((1, c_pad), lambda i: (0, 0)),       # b2 (padded)
                ],
                out_specs=pl.BlockSpec((tb, c_pad), lambda i: (i, 0)),
            ),
            compiler_params=pltpu.CompilerParams(
                dimension_semantics=("parallel",),
                vmem_limit_bytes=_VMEM_LIMIT_BYTES,
            ),
        )(x0, w1, b1, w2, b2)

    elif sen_rep_type == "mp":
        itemsize = jnp.dtype(features.dtype).itemsize
        tt = _choose_seq_tile(T, tb, D, itemsize)
        t_pad = _round_up(T, tt)
        nt = t_pad // tt

        feats = features
        if (b_pad, t_pad) != (B, T):
            feats = jnp.pad(feats, ((0, b_pad - B), (0, t_pad - T), (0, 0)))

        if src_lengths is not None:
            inv_len = (1.0 / src_lengths.astype(jnp.float32)).reshape(B, 1)
        else:
            inv_len = jnp.full((B, 1), 1.0 / T, dtype=jnp.float32)
        if b_pad != B:
            inv_len = jnp.pad(inv_len, ((0, b_pad - B), (0, 0)), constant_values=1.0)

        kernel = functools.partial(_mp_head_kernel, activation=activation)
        out = pl.pallas_call(
            kernel,
            out_shape=jax.ShapeDtypeStruct((b_pad, c_pad), features.dtype),
            grid_spec=pltpu.PrefetchScalarGridSpec(
                num_scalar_prefetch=0,
                grid=(nb, nt),                                        # seq axis last ("arbitrary")
                in_specs=[
                    pl.BlockSpec((tb, tt, D), lambda b, t: (b, t, 0)),   # features tile
                    pl.BlockSpec((tb, 1), lambda b, t: (b, 0)),          # 1/length per row
                    pl.BlockSpec((D, inner), lambda b, t: (0, 0)),
                    pl.BlockSpec((1, inner), lambda b, t: (0, 0)),
                    pl.BlockSpec((inner, c_pad), lambda b, t: (0, 0)),
                    pl.BlockSpec((1, c_pad), lambda b, t: (0, 0)),
                ],
                out_specs=pl.BlockSpec((tb, c_pad), lambda b, t: (b, 0)),
                scratch_shapes=[pltpu.VMEM((tb, D), jnp.float32)],       # f32 seq-sum accumulator
            ),
            compiler_params=pltpu.CompilerParams(
                dimension_semantics=("parallel", "arbitrary"),
                vmem_limit_bytes=_VMEM_LIMIT_BYTES,
            ),
        )(feats, inv_len, w1, b1, w2, b2)
    else:
        raise NotImplementedError("sen_rep_type must be 'cls' or 'mp'")

    # TODO(synk): training-mode pooler_dropout (needs in-kernel PRNG); inference = identity.
    return out[:B, :C]


# ----------------------------- reference & test -------------------------------


def _reference(features, w1, b1, w2, b2, sen_rep_type="cls", src_lengths=None):
    if sen_rep_type == "cls":
        x = features[:, 0, :]
    elif src_lengths is not None:
        x = features.sum(axis=1) / src_lengths[:, None]
    else:
        x = jnp.mean(features, axis=1)
    h = jnp.tanh(x.astype(jnp.float32) @ w1 + b1.reshape(1, -1))
    y = h @ w2 + b2.reshape(1, -1)
    return y.astype(features.dtype)


if __name__ == "__main__":
    # Small, deterministic example consistent with the module:
    #   input_dim = 32, inner_dim = 32, num_classes = 4, batch = 8, seq = 16
    B, T, D, INNER, C = 8, 16, 32, 32, 4

    key = jax.random.PRNGKey(0)
    k_feat, k_w1, k_b1, k_w2, k_b2 = jax.random.split(key, 5)

    features = jax.random.normal(k_feat, (B, T, D), dtype=jnp.float32)
    w1 = jax.random.normal(k_w1, (D, INNER), dtype=jnp.float32) * 0.05
    b1 = jax.random.normal(k_b1, (INNER,), dtype=jnp.float32) * 0.01
    w2 = jax.random.normal(k_w2, (INNER, C), dtype=jnp.float32) * 0.05
    b2 = jax.random.normal(k_b2, (C,), dtype=jnp.float32) * 0.01

    # cls pooling
    out_cls = smlp_classification_head(features, w1, b1, w2, b2, sen_rep_type="cls")
    out_cls = jax.block_until_ready(out_cls)
    ref_cls = _reference(features, w1, b1, w2, b2, "cls")
    assert out_cls.shape == (B, C)
    assert jnp.allclose(out_cls, ref_cls, atol=1e-5, rtol=1e-5)

    # mean pooling
    out_mp = smlp_classification_head(features, w1, b1, w2, b2, sen_rep_type="mp")
    out_mp = jax.block_until_ready(out_mp)
    ref_mp = _reference(features, w1, b1, w2, b2, "mp")
    assert out_mp.shape == (B, C)
    assert jnp.allclose(out_mp, ref_mp, atol=1e-5, rtol=1e-5)

    print("KERNEL_OK")
</pallas_src>

<mosaic_0001>
module attributes {stable_mosaic.version = 11 : i64} {
  func.func @_cls_head_kernel(%arg0: i32, %arg1: memref<8x32xf32, #tpu.memory_space<vmem>>, %arg2: memref<32x32xf32, #tpu.memory_space<vmem>>, %arg3: memref<1x32xf32, #tpu.memory_space<vmem>>, %arg4: memref<32x128xf32, #tpu.memory_space<vmem>>, %arg5: memref<1x128xf32, #tpu.memory_space<vmem>>, %arg6: memref<8x128xf32, #tpu.memory_space<vmem>>) attributes {dimension_semantics = [#tpu.dimension_semantics<parallel>], iteration_bounds = array<i64: 1>, scalar_prefetch = 0 : i64, scratch_operands = 0 : i64, tpu.core_type = #tpu.core_type<tc>, window_params = [{transform_indices = @transform_0, window_bounds = array<i64: 8, 32>}, {pipeline_mode = #tpu.pipeline_mode<synchronous>, transform_indices = @transform_1, window_bounds = array<i64: 32, 32>}, {pipeline_mode = #tpu.pipeline_mode<synchronous>, transform_indices = @transform_2, window_bounds = array<i64: 1, 32>}, {pipeline_mode = #tpu.pipeline_mode<synchronous>, transform_indices = @transform_3, window_bounds = array<i64: 32, 128>}, {pipeline_mode = #tpu.pipeline_mode<synchronous>, transform_indices = @transform_4, window_bounds = array<i64: 1, 128>}, {transform_indices = @transform_5, window_bounds = array<i64: 8, 128>}]} {
    %c0 = arith.constant 0 : index
    %c0_0 = arith.constant 0 : index
    %0 = vector.load %arg1[%c0, %c0_0] : memref<8x32xf32, #tpu.memory_space<vmem>>, vector<8x32xf32>
    %c0_1 = arith.constant 0 : index
    %c0_2 = arith.constant 0 : index
    %1 = vector.load %arg2[%c0_1, %c0_2] : memref<32x32xf32, #tpu.memory_space<vmem>>, vector<32x32xf32>
    %cst = arith.constant dense<0.000000e+00> : vector<8x32xf32>
    %2 = tpu.matmul %0, %1, %cst {dimension_numbers = #tpu.dot_dimension_numbers<[1], [0], [0], [1], [0, 0, 1, 1], [], []>} : vector<8x32xf32>, vector<32x32xf32>, vector<8x32xf32> -> vector<8x32xf32>
    %c0_3 = arith.constant 0 : index
    %c0_4 = arith.constant 0 : index
    %3 = vector.load %arg3[%c0_3, %c0_4] : memref<1x32xf32, #tpu.memory_space<vmem>>, vector<1x32xf32>
    %4 = vector.broadcast %3 : vector<1x32xf32> to vector<8x32xf32>
    %5 = arith.addf %2, %4 : vector<8x32xf32>
    %6 = math.tanh %5 : vector<8x32xf32>
    %c0_5 = arith.constant 0 : index
    %c0_6 = arith.constant 0 : index
    %7 = vector.load %arg4[%c0_5, %c0_6] : memref<32x128xf32, #tpu.memory_space<vmem>>, vector<32x128xf32>
    %cst_7 = arith.constant dense<0.000000e+00> : vector<8x128xf32>
    %8 = tpu.matmul %6, %7, %cst_7 {dimension_numbers = #tpu.dot_dimension_numbers<[1], [0], [0], [1], [0, 0, 1, 1], [], []>} : vector<8x32xf32>, vector<32x128xf32>, vector<8x128xf32> -> vector<8x128xf32>
    %c0_8 = arith.constant 0 : index
    %c0_9 = arith.constant 0 : index
    %9 = vector.load %arg5[%c0_8, %c0_9] : memref<1x128xf32, #tpu.memory_space<vmem>>, vector<1x128xf32>
    %10 = vector.broadcast %9 : vector<1x128xf32> to vector<8x128xf32>
    %11 = arith.addf %8, %10 : vector<8x128xf32>
    %c0_10 = arith.constant 0 : index
    %c0_11 = arith.constant 0 : index
    %12 = vector.load %arg6[%c0_10, %c0_11] : memref<8x128xf32, #tpu.memory_space<vmem>>, vector<8x128xf32>
    tpu.vector_store %arg6[%c0_10, %c0_11], %11 {strides = array<i32>} : memref<8x128xf32, #tpu.memory_space<vmem>>, vector<8x128xf32>,
    return
  }
  func.func @transform_0(%arg0: i32) -> (i32, i32) {
    %c0_i32 = arith.constant 0 : i32
    %c0_i32_0 = arith.constant 0 : i32
    return %arg0, %c0_i32 : i32, i32
  }
  func.func @transform_1(%arg0: i32) -> (i32, i32) {
    %c0_i32 = arith.constant 0 : i32
    %c0_i32_0 = arith.constant 0 : i32
    %c0_i32_1 = arith.constant 0 : i32
    return %c0_i32, %c0_i32_0 : i32, i32
  }
  func.func @transform_2(%arg0: i32) -> (i32, i32) {
    %c0_i32 = arith.constant 0 : i32
    %c0_i32_0 = arith.constant 0 : i32
    %c0_i32_1 = arith.constant 0 : i32
    return %c0_i32, %c0_i32_0 : i32, i32
  }
  func.func @transform_3(%arg0: i32) -> (i32, i32) {
    %c0_i32 = arith.constant 0 : i32
    %c0_i32_0 = arith.constant 0 : i32
    %c0_i32_1 = arith.constant 0 : i32
    return %c0_i32, %c0_i32_0 : i32, i32
  }
  func.func @transform_4(%arg0: i32) -> (i32, i32) {
    %c0_i32 = arith.constant 0 : i32
    %c0_i32_0 = arith.constant 0 : i32
    %c0_i32_1 = arith.constant 0 : i32
    return %c0_i32, %c0_i32_0 : i32, i32
  }
  func.func @transform_5(%arg0: i32) -> (i32, i32) {
    %c0_i32 = arith.constant 0 : i32
    %c0_i32_0 = arith.constant 0 : i32
    return %arg0, %c0_i32 : i32, i32
  }
}

</mosaic_0001>

<llo_original>
// kernel: tpu_custom_call.1
$region0: #{tpu_custom_call.1}
  #allocation0 [shape = 'u32[]', space=smem, size = 0x4, offset = 0x4, fixed_abs, tag = 'smem constant byte address 0x4 - core index']
  #allocation1 [shape = 'u32[72,128]{1,0:T(1,128)}', space=vmem, size = 0x9000, scoped, tag = 'internal scratch']
  %s0 = inlined_call_operand.hbm [shape: f32[8,32], index: 0, kind: input, shape index: {}]
  %s1 = inlined_call_operand.hbm [shape: f32[32,32], index: 1, kind: input, shape index: {}]
  %s2 = inlined_call_operand.vmem [shape: f32[1,32], index: 2, kind: input, shape index: {}]
  %s3 = inlined_call_operand.hbm [shape: f32[32,128], index: 3, kind: input, shape index: {}]
  %s4 = inlined_call_operand.vmem [shape: f32[1,128], index: 4, kind: input, shape index: {}]
  %s5 = inlined_call_operand.hbm [shape: f32[8,128], index: 5, kind: output, shape index: {}]
  %s6 = sld [smem:[#allocation0]]
  $region42: #{tpu_custom_call.1} parent=0
    _
  %s8 = ssub.s32 1, %s6
  %s9 = scalar_select 0, %s8, %s6
  $region1: #{tpu_custom_call.1} parent=0
    #allocation2 [shape = 'u8[4096]{0}', space=vmem, size = 0x1000, scoped, tag = 'input window, operand 0, single buffered']
    #allocation3 [shape = 's32[1]{0}', space=sflag, size = 0x4, scoped, tag = 'scoped memory for tpu_custom_call.1']
    #allocation4 [shape = 's32[1]{0}', space=sflag, size = 0x4, scoped, tag = 'scoped memory for tpu_custom_call.1']
    #allocation5 [shape = 'u8[16384]{0}', space=vmem, size = 0x4000, scoped, tag = 'input window, operand 1, single buffered']
    #allocation6 [shape = 's32[1]{0}', space=sflag, size = 0x4, scoped, tag = 'scoped memory for tpu_custom_call.1']
    #allocation7 [shape = 'u8[16384]{0}', space=vmem, size = 0x4000, scoped, tag = 'input window, operand 3, single buffered']
    #allocation8 [shape = 'u8[4096]{0}', space=vmem, size = 0x1000, scoped, tag = 'output window, operand 0, single buffered']
    %10 = vsyncpa [#allocation3], 0
    %11 = vsyncpa [#allocation6], 0
    %12 = vsyncpa [#allocation4], 0
    // Predicated region
    $region2: #{tpu_custom_call.1} parent=1 // pred_check
      _
    $region3: #{tpu_custom_call.1} parent=1 // pred_check_branch
      %14 = sbr.rel (0) target = $region5
    $region4: #{tpu_custom_call.1} parent=1 // pred_region
      %16 = vsyncadd [#allocation3], 0
      %s18 = sshll.u32 %s0, 4
      %s19 = int_to_ptr.hbm [resolvable:$true] %s18
      %s20 = sshll.u32 [#allocation2], 4
      %s21 = int_to_ptr.vmem [resolvable:$true] %s20
      %23 = dma.hbm_to_vmem [thread:$0]  %s19, 128, %s21, [#allocation3]
    $region5: #{tpu_custom_call.1} parent=1 // pred_fallthru
      _
    // Predicated region
    $region6: #{tpu_custom_call.1} parent=1 // pred_check
      _
    $region7: #{tpu_custom_call.1} parent=1 // pred_check_branch
      %25 = sbr.rel (0) target = $region9
    $region8: #{tpu_custom_call.1} parent=1 // pred_region
      %27 = vsyncadd [#allocation6], 0
      %s28 = sshll.u32 %s1, 4
      %s29 = int_to_ptr.hbm [resolvable:$true] %s28
      %s30 = sshll.u32 [#allocation5], 4
      %s31 = int_to_ptr.vmem [resolvable:$true] %s30
      %36 = dma.hbm_to_vmem [thread:$0]  %s29, 512, %s31, [#allocation6], 128, 128, 8
    $region9: #{tpu_custom_call.1} parent=1 // pred_fallthru
      _
    // Predicated region
    $region10: #{tpu_custom_call.1} parent=1 // pred_check
      _
    $region11: #{tpu_custom_call.1} parent=1 // pred_check_branch
      %38 = sbr.rel (0) target = $region13
    $region12: #{tpu_custom_call.1} parent=1 // pred_region
      _
    $region13: #{tpu_custom_call.1} parent=1 // pred_fallthru
      _
    // Predicated region
    $region14: #{tpu_custom_call.1} parent=1 // pred_check
      _
    $region15: #{tpu_custom_call.1} parent=1 // pred_check_branch
      %40 = sbr.rel (0) target = $region17
    $region16: #{tpu_custom_call.1} parent=1 // pred_region
      %42 = vsyncadd [#allocation6], 0
      %s43 = sshll.u32 %s3, 4
      %s44 = int_to_ptr.hbm [resolvable:$true] %s43
      %s45 = sshll.u32 [#allocation7], 4
      %s46 = int_to_ptr.vmem [resolvable:$true] %s45
      %51 = dma.hbm_to_vmem [thread:$0]  %s44, 512, %s46, [#allocation6], 128, 128, 8
    $region17: #{tpu_custom_call.1} parent=1 // pred_fallthru
      _
    // Predicated region
    $region18: #{tpu_custom_call.1} parent=1 // pred_check
      _
    $region19: #{tpu_custom_call.1} parent=1 // pred_check_branch
      %53 = sbr.rel (0) target = $region21
    $region20: #{tpu_custom_call.1} parent=1 // pred_region
      _
    $region21: #{tpu_custom_call.1} parent=1 // pred_fallthru
      _
    // Predicated region
    $region22: #{tpu_custom_call.1} parent=1 // pred_check
      _
    $region23: #{tpu_custom_call.1} parent=1 // pred_check_branch
      %55 = sbr.rel (0) target = $region25
    $region24: #{tpu_custom_call.1} parent=1 // pred_region
      %57 = dma.done [#allocation3], 128
    $region25: #{tpu_custom_call.1} parent=1 // pred_fallthru
      _
    // Predicated region
    $region26: #{tpu_custom_call.1} parent=1 // pred_check
      _
    $region27: #{tpu_custom_call.1} parent=1 // pred_check_branch
      %59 = sbr.rel (0) target = $region29
    $region28: #{tpu_custom_call.1} parent=1 // pred_region
      %61 = dma.done [#allocation6], 512
    $region29: #{tpu_custom_call.1} parent=1 // pred_fallthru
      _
    // Predicated region
    $region30: #{tpu_custom_call.1} parent=1 // pred_check
      _
    $region31: #{tpu_custom_call.1} parent=1 // pred_check_branch
      %63 = sbr.rel (0) target = $region33
    $region32: #{tpu_custom_call.1} parent=1 // pred_region
      %65 = dma.done [#allocation6], 512
    $region33: #{tpu_custom_call.1} parent=1 // pred_fallthru
      _
    %v66 = vld [vmem:[#allocation2] sm:$0xff]
    %v67 = vld [vmem:[#allocation5] sm:$0xff]
    %v68 = vld [vmem:[#allocation5 + $0x8] sm:$0xff]
    %v69 = vld [vmem:[#allocation5 + $0x10] sm:$0xff]
    %v70 = vld [vmem:[#allocation5 + $0x18] sm:$0xff]
    %v71 = vld [vmem:[%s2] sm:$0x1]
    %v73 = vperm.slane %v71, 0
    %vm75 = vcmask 261120
    %v77 = vsel %vm75, %v66, 0
    %79 = vmatpush.msra.mxu0 0.0
    %80 = vmatpush.msra.mxu0 0.0
    %81 = vmatpush.msra.mxu0 0.0
    %82 = vmatpush.msra.mxu0 0.0
    %83 = vmatpush.msra.mxu0 0.0
    %84 = vmatpush.msra.mxu0 0.0
    %85 = vmatpush.msra.mxu0 0.0
    %86 = vmatpush.msra.mxu0 0.0
    %87 = vmatpush.msra.mxu0 0.0
    %88 = vmatpush.msra.mxu0 0.0
    %89 = vmatpush.msra.mxu0 0.0
    %90 = vmatpush.msra.mxu0 0.0
    %91 = vmatpush.msra.mxu0 %v70
    %92 = vmatpush.msra.mxu0 %v69
    %93 = vmatpush.msra.mxu0 %v68
    %94 = vmatpush.msra.mxu0 %v67
    %95 = vmatmul.f32.gmra.mxu0 %v77
    %v96 = vpop.f32.mrf.mxu0
    %v97 = vadd.f32 %v73, %v96
    %98 = vdwg.mxu0
    %v99 = vtanh.pop %v97
    %v100 = vld [vmem:[#allocation7] sm:$0xff]
    %v101 = vld [vmem:[#allocation7 + $0x8] sm:$0xff]
    %v102 = vld [vmem:[#allocation7 + $0x10] sm:$0xff]
    %v103 = vld [vmem:[#allocation7 + $0x18] sm:$0xff]
    %v104 = vld [vmem:[%s4] sm:$0x1]
    %v106 = vperm.slane %v104, 0
    %v109 = vsel %vm75, %v99, 0
    %111 = vmatpush.msra.mxu0 0.0
    %112 = vmatpush.msra.mxu0 0.0
    %113 = vmatpush.msra.mxu0 0.0
    %114 = vmatpush.msra.mxu0 0.0
    %115 = vmatpush.msra.mxu0 0.0
    %116 = vmatpush.msra.mxu0 0.0
    %117 = vmatpush.msra.mxu0 0.0
    %118 = vmatpush.msra.mxu0 0.0
    %119 = vmatpush.msra.mxu0 0.0
    %120 = vmatpush.msra.mxu0 0.0
    %121 = vmatpush.msra.mxu0 0.0
    %122 = vmatpush.msra.mxu0 0.0
    %123 = vmatpush.msra.mxu0 %v103
    %124 = vmatpush.msra.mxu0 %v102
    %125 = vmatpush.msra.mxu0 %v101
    %126 = vmatpush.msra.mxu0 %v100
    %127 = vmatmul.f32.gmra.mxu0 %v109
    %v128 = vpop.f32.mrf.mxu0
    %v129 = vadd.f32 %v106, %v128
    %130 = vdwg.mxu0
    %131 = vst [vmem:[#allocation8] sm:$0xff] %v129
    // Predicated region
    $region34: #{tpu_custom_call.1} parent=1 // pred_check
      _
    $region35: #{tpu_custom_call.1} parent=1 // pred_check_branch
      %133 = sbr.rel (0) target = $region37
    $region36: #{tpu_custom_call.1} parent=1 // pred_region
      %135 = vsyncadd [#allocation4], 0
      %s137 = sshll.u32 [#allocation8], 4
      %s138 = int_to_ptr.vmem [resolvable:$true] %s137
      %s139 = sshll.u32 %s5, 4
      %s140 = int_to_ptr.hbm [resolvable:$true] %s139
      %142 = dma.vmem_to_hbm [thread:$0]  %s138, 128, %s140, [#allocation4]
    $region37: #{tpu_custom_call.1} parent=1 // pred_fallthru
      _
    // Predicated region
    $region38: #{tpu_custom_call.1} parent=1 // pred_check
      _
    $region39: #{tpu_custom_call.1} parent=1 // pred_check_branch
      %144 = sbr.rel (0) target = $region41
    $region40: #{tpu_custom_call.1} parent=1 // pred_region
      %146 = dma.done [#allocation4], 128
    $region41: #{tpu_custom_call.1} parent=1 // pred_fallthru
      _
    %147 = vsyncpa [#allocation3], 1
    %148 = vsyncpa [#allocation6], 1
    %149 = vsyncpa [#allocation4], 1

</llo_original>
